<compile_context>
chip_gen: v7x
topology: tpu7x:2x2x1
jax: 0.10.0
libtpu: 0.0.40
codegen_flags: <defaults>
</compile_context>

<pallas_src>
import jax
import jax.numpy as jnp
from jax.experimental import pallas as pl
from jax.experimental.pallas import tpu as pltpu


_LANES = 128
_SUBLANES = 8
# ~2 MiB x blocks: big enough for ~85%+ of HBM roofline, small enough that the
# double-buffered working set fits every generation's scoped VMEM default.
_TARGET_BLOCK_BYTES = 2 * 1024 * 1024
# Cap on spatial rows per tile (256 rows * 128 lanes * 4 B = 128 KiB of noise).
_MAX_SPATIAL_ROWS = 256


def _round_up(x, m):
    return ((x + m - 1) // m) * m


def _choose_spatial_tile(nrows):
    """Largest row-tile (multiple of 8) dividing nrows, capped at _MAX_SPATIAL_ROWS."""
    if nrows <= _SUBLANES:
        return nrows  # full extent; < 8 allowed when it covers the whole dim
    ts = min(nrows, (_MAX_SPATIAL_ROWS // _SUBLANES) * _SUBLANES)
    ts = (ts // _SUBLANES) * _SUBLANES
    while nrows % ts != 0:
        ts -= _SUBLANES
    return max(ts, _SUBLANES)


def _choose_channel_tile(C, ts, dtype_bytes):
    """Largest divisor of C keeping the x block near the ~2 MiB budget."""
    max_tc = max(1, _TARGET_BLOCK_BYTES // (ts * _LANES * dtype_bytes))
    if C <= max_tc:
        return C
    tc = max_tc
    while C % tc != 0:
        tc -= 1
    return tc


def _noise_fusion_kernel(x_ref, n_ref, w_ref, o_ref):
    x = x_ref[...].astype(jnp.float32)   # (1, tc, ts, 128)
    n = n_ref[...].astype(jnp.float32)   # (1, 1,  ts, 128) -> broadcasts over tc
    w = w_ref[...].astype(jnp.float32)   # (1, tc, 1,  128) -> broadcasts over ts
    o_ref[...] = (x + w * n).astype(o_ref.dtype)


def noise_fusion(x, weight, key_or_seed=0, *, return_noise=False):
    """x: (B, C, H, W); weight: (1, C, 1, 1).

    Returns out (and the generated noise (B, 1, H, W) if return_noise=True).
    """
    B, C, H, W = x.shape
    assert weight.shape == (1, C, 1, 1), weight.shape
    dtype_bytes = jnp.dtype(x.dtype).itemsize

    if isinstance(key_or_seed, (int,)):
        key = jax.random.PRNGKey(key_or_seed)
    else:
        key = key_or_seed
    # Same contract as torch.randn in the PyTorch forward: one noise map per
    # batch element, broadcast over channels.
    noise = jax.random.normal(key, (B, 1, H, W), dtype=jnp.float32)

    HW = H * W
    hw_pad = _round_up(HW, _LANES)
    nrows = hw_pad // _LANES
    if nrows > _SUBLANES and nrows % _SUBLANES != 0:
        nrows = _round_up(nrows, _SUBLANES)
        hw_pad = nrows * _LANES

    ts = _choose_spatial_tile(nrows)
    tc = _choose_channel_tile(C, ts, dtype_bytes)
    n_s = nrows // ts
    n_c = C // tc

    def _flatten_pad(a, ch):
        a = a.reshape(B, ch, HW)
        if hw_pad != HW:
            # TODO(synk): a masked remainder tile would avoid this extra copy.
            a = jnp.pad(a, ((0, 0), (0, 0), (0, hw_pad - HW)))
        return a.reshape(B, ch, nrows, _LANES)

    x_r = _flatten_pad(x, C)
    n_r = _flatten_pad(noise, 1)

    # Pre-broadcast weight along lanes so the in-kernel broadcast is the cheap
    # leading-dim / sublane case; only C*128 floats, fetched once and resident.
    w_r = jnp.broadcast_to(
        weight.reshape(1, C, 1, 1).astype(jnp.float32), (1, C, 1, _LANES)
    )

    bytes_accessed = (
        x_r.size * dtype_bytes            # read x
        + x_r.size * dtype_bytes          # write out
        + n_r.size * 4                    # read noise (once per (b, s))
        + C * _LANES * 4                  # weight (once)
    )
    cost = pl.CostEstimate(
        flops=2 * B * C * hw_pad,
        transcendentals=0,
        bytes_accessed=bytes_accessed,
    )

    out_r = pl.pallas_call(
        _noise_fusion_kernel,
        out_shape=jax.ShapeDtypeStruct((B, C, nrows, _LANES), x.dtype),
        grid_spec=pl.GridSpec(
            grid=(B, n_s, n_c),
            in_specs=[
                pl.BlockSpec((1, tc, ts, _LANES), lambda b, s, c: (b, c, s, 0)),
                pl.BlockSpec((1, 1, ts, _LANES), lambda b, s, c: (b, 0, s, 0)),
                pl.BlockSpec((1, tc, 1, _LANES), lambda b, s, c: (0, c, 0, 0)),
            ],
            out_specs=pl.BlockSpec(
                (1, tc, ts, _LANES), lambda b, s, c: (b, c, s, 0)
            ),
        ),
        compiler_params=pltpu.CompilerParams(
            # B and spatial tiles are independent -> shard across TensorCores;
            # the channel-tile axis reuses the resident noise/weight blocks.
            dimension_semantics=("parallel", "parallel", "arbitrary"),
            vmem_limit_bytes=32 * 1024 * 1024,
        ),
        cost_estimate=cost,
    )(x_r, n_r, w_r)

    out = out_r.reshape(B, C, hw_pad)[:, :, :HW].reshape(B, C, H, W)
    if not return_noise:
        return out
    return out, noise


class NoiseFusionPallas:
    """Mirror of the PyTorch NoiseFusion module (weight zero-initialized)."""

    def __init__(self, in_channel):
        self.weight = jnp.zeros((1, in_channel, 1, 1), dtype=jnp.float32)

    def __call__(self, x, seed=0):
        # Same contract as the torch forward: noise is drawn internally and
        # only the fused output is returned.
        return noise_fusion(x, self.weight, seed)


if __name__ == "__main__":
    key = jax.random.PRNGKey(0)
    k_x, k_w = jax.random.split(key, 2)

    B, C, H, W = 2, 4, 16, 16
    x = jax.random.normal(k_x, (B, C, H, W), dtype=jnp.float32)

    # 1) Module exactly as __init__'d (zero weight): out must equal x.
    mod = NoiseFusionPallas(in_channel=C)
    out = jax.block_until_ready(mod(x, seed=0))
    assert out.shape == (B, C, H, W)
    assert jnp.allclose(out, x, atol=0.0), "zero-weight output must equal x"

    # 2) Non-zero weight: get the noise the kernel consumed and verify the
    #    broadcast FMA out = x + w * noise (same noise for every channel).
    w_nz = jax.random.normal(k_w, (1, C, 1, 1), dtype=jnp.float32)
    out_nz, noise = noise_fusion(x, w_nz, 123, return_noise=True)
    out_nz = jax.block_until_ready(out_nz)
    assert noise.shape == (B, 1, H, W)
    ref_nz = x + w_nz * noise
    assert jnp.allclose(out_nz, ref_nz, atol=1e-5), "mismatch with nonzero weight"

    # 3) Loose sanity on the Gaussian noise and determinism per seed.
    n_mean = float(jnp.mean(noise))
    n_std = float(jnp.std(noise))
    assert abs(n_mean) < 0.4 and 0.6 < n_std < 1.4, (n_mean, n_std)
    _, noise2 = noise_fusion(x, w_nz, 123, return_noise=True)
    assert jnp.allclose(noise, noise2), "noise must be deterministic per seed"

    print("KERNEL_OK")
</pallas_src>

<mosaic_0001>
module attributes {stable_mosaic.version = 11 : i64} {
  func.func @_noise_fusion_kernel(%arg0: i32, %arg1: i32, %arg2: i32, %arg3: memref<1x4x2x128xf32, #tpu.memory_space<vmem>>, %arg4: memref<1x1x2x128xf32, #tpu.memory_space<vmem>>, %arg5: memref<1x4x1x128xf32, #tpu.memory_space<vmem>>, %arg6: memref<1x4x2x128xf32, #tpu.memory_space<vmem>>) attributes {dimension_semantics = [#tpu.dimension_semantics<parallel>, #tpu.dimension_semantics<parallel>, #tpu.dimension_semantics<arbitrary>], iteration_bounds = array<i64: 2, 1, 1>, scalar_prefetch = 0 : i64, scratch_operands = 0 : i64, tpu.core_type = #tpu.core_type<tc>, window_params = [{transform_indices = @transform_0, window_bounds = array<i64: 1, 4, 2, 128>}, {transform_indices = @transform_1, window_bounds = array<i64: 1, 1, 2, 128>}, {transform_indices = @transform_2, window_bounds = array<i64: 1, 4, 1, 128>}, {transform_indices = @transform_3, window_bounds = array<i64: 1, 4, 2, 128>}]} {
    %c0 = arith.constant 0 : index
    %c0_0 = arith.constant 0 : index
    %c0_1 = arith.constant 0 : index
    %c0_2 = arith.constant 0 : index
    %0 = vector.load %arg3[%c0, %c0_0, %c0_1, %c0_2] : memref<1x4x2x128xf32, #tpu.memory_space<vmem>>, vector<1x4x2x128xf32>
    %c0_3 = arith.constant 0 : index
    %c0_4 = arith.constant 0 : index
    %c0_5 = arith.constant 0 : index
    %c0_6 = arith.constant 0 : index
    %1 = vector.load %arg4[%c0_3, %c0_4, %c0_5, %c0_6] : memref<1x1x2x128xf32, #tpu.memory_space<vmem>>, vector<1x1x2x128xf32>
    %c0_7 = arith.constant 0 : index
    %c0_8 = arith.constant 0 : index
    %c0_9 = arith.constant 0 : index
    %c0_10 = arith.constant 0 : index
    %2 = vector.load %arg5[%c0_7, %c0_8, %c0_9, %c0_10] : memref<1x4x1x128xf32, #tpu.memory_space<vmem>>, vector<1x4x1x128xf32>
    %3 = vector.broadcast %2 : vector<1x4x1x128xf32> to vector<1x4x2x128xf32>
    %4 = vector.broadcast %1 : vector<1x1x2x128xf32> to vector<1x4x2x128xf32>
    %5 = arith.mulf %3, %4 : vector<1x4x2x128xf32>
    %6 = arith.addf %0, %5 : vector<1x4x2x128xf32>
    %c0_11 = arith.constant 0 : index
    %c0_12 = arith.constant 0 : index
    %c0_13 = arith.constant 0 : index
    %c0_14 = arith.constant 0 : index
    %7 = vector.load %arg6[%c0_11, %c0_12, %c0_13, %c0_14] : memref<1x4x2x128xf32, #tpu.memory_space<vmem>>, vector<1x4x2x128xf32>
    tpu.vector_store %arg6[%c0_11, %c0_12, %c0_13, %c0_14], %6 {strides = array<i32>} : memref<1x4x2x128xf32, #tpu.memory_space<vmem>>, vector<1x4x2x128xf32>,
    return
  }
  func.func @transform_0(%arg0: i32, %arg1: i32, %arg2: i32) -> (i32, i32, i32, i32) {
    %c0_i32 = arith.constant 0 : i32
    %c0_i32_0 = arith.constant 0 : i32
    return %arg0, %arg2, %arg1, %c0_i32 : i32, i32, i32, i32
  }
  func.func @transform_1(%arg0: i32, %arg1: i32, %arg2: i32) -> (i32, i32, i32, i32) {
    %c0_i32 = arith.constant 0 : i32
    %c0_i32_0 = arith.constant 0 : i32
    %c0_i32_1 = arith.constant 0 : i32
    return %arg0, %c0_i32, %arg1, %c0_i32_0 : i32, i32, i32, i32
  }
  func.func @transform_2(%arg0: i32, %arg1: i32, %arg2: i32) -> (i32, i32, i32, i32) {
    %c0_i32 = arith.constant 0 : i32
    %c0_i32_0 = arith.constant 0 : i32
    %c0_i32_1 = arith.constant 0 : i32
    %c0_i32_2 = arith.constant 0 : i32
    return %c0_i32, %arg2, %c0_i32_0, %c0_i32_1 : i32, i32, i32, i32
  }
  func.func @transform_3(%arg0: i32, %arg1: i32, %arg2: i32) -> (i32, i32, i32, i32) {
    %c0_i32 = arith.constant 0 : i32
    %c0_i32_0 = arith.constant 0 : i32
    return %arg0, %arg2, %arg1, %c0_i32 : i32, i32, i32, i32
  }
}

</mosaic_0001>

<llo_original>
// kernel: tpu_custom_call.1
$region0: #{tpu_custom_call.1}
  #allocation0 [shape = 'u32[]', space=smem, size = 0x4, offset = 0x4, fixed_abs, tag = 'smem constant byte address 0x4 - core index']
  #allocation1 [shape = 'u32[144,128]{1,0:T(1,128)}', space=vmem, size = 0x12000, scoped, tag = 'internal scratch']
  %s0 = inlined_call_operand.hbm [shape: f32[2,4,2,128], index: 0, kind: input, shape index: {}]
  %s1 = inlined_call_operand.hbm [shape: f32[2,1,2,128], index: 1, kind: input, shape index: {}]
  %s2 = inlined_call_operand.vmem [shape: f32[1,4,1,128], index: 2, kind: input, shape index: {}]
  %s3 = inlined_call_operand.hbm [shape: f32[2,4,2,128], index: 3, kind: output, shape index: {}]
  %s4 = sld [smem:[#allocation0]]
  $region53: #{tpu_custom_call.1} parent=0
    _
  %s6 = ssub.s32 1, %s4
  %s7 = scalar_select 0, %s6, %s4
  $region1: #{tpu_custom_call.1} parent=0
    #allocation2 [shape = 'u8[8192]{0}', space=vmem, size = 0x2000, scoped, tag = 'input window, operand 0']
    #allocation3 [shape = 's32[2]{0}', space=sflag, size = 0x8, scoped, tag = 'scoped memory for tpu_custom_call.1']
    #allocation4 [shape = 's32[2]{0}', space=sflag, size = 0x8, scoped, tag = 'scoped memory for tpu_custom_call.1']
    #allocation5 [shape = 'u8[2048]{0}', space=vmem, size = 0x800, scoped, tag = 'input window, operand 1']
    #allocation6 [shape = 's32[2]{0}', space=sflag, size = 0x8, scoped, tag = 'scoped memory for tpu_custom_call.1']
    #allocation7 [shape = 'u8[8192]{0}', space=vmem, size = 0x2000, scoped, tag = 'output window, operand 0']
    %8 = vsyncpa [#allocation3], 0
    %s9 = scalar_lea.sflag [#allocation3], 1
    %10 = vsyncpa %s9, 0
    %11 = vsyncpa [#allocation6], 0
    %s12 = scalar_lea.sflag [#allocation6], 1
    %13 = vsyncpa %s12, 0
    %14 = vsyncpa [#allocation4], 0
    %s15 = scalar_lea.sflag [#allocation4], 1
    %16 = vsyncpa %s15, 0
    loop: start=0, step=1, limit=4
    $region2: #{tpu_custom_call.1} parent=1 // loop_pre_header
      _
    $region3: #{tpu_custom_call.1} parent=1 // loop_header
      %s18 = sphi 0, %s22
      %p19 = scmp.ge.s32.totalorder %s18, 4
      %s25 = sphi 0, %s44
      %s26 = sphi 0, %s40
      %s27 = sphi 0, %s36
      %s28 = sphi 0, %s25
      %s29 = sphi 0, %s26
      %s30 = sphi 0, %s27
      %s31 = sphi 0, %s28
      %s32 = sphi 0, %s29
      %s33 = sphi 0, %s30
      %s51 = sphi 0, %s53
      %s54 = sphi 0, %s51
      %s55 = sphi 0, %s54
      %s71 = sphi 0, %s55
      %s79 = sphi 0, %s81
      %s82 = sphi 0, %s79
      %s83 = sphi 0, %s82
      %s99 = sphi 0, %s83
      %s105 = sphi 0, %s107
      %s108 = sphi 0, %s105
      %s109 = sphi 0, %s108
      %s125 = sphi 0, %s109
      %s135 = sphi 0, %s137
      %s138 = sphi 0, %s135
      %s139 = sphi 0, %s138
      %s155 = sphi 0, %s139
    $region4: #{tpu_custom_call.1} parent=1 // loop_header_branch
      %21 = sbr.rel (%p19) target = $region8
    $region5: #{tpu_custom_call.1} parent=1 // loop_body
      %s23 = ssub.s32 %s18, 1
      %s24 = ssub.s32 %s18, 2
      %s34 = sadd.s32 1, %s27
      %p35 = scmp.ge.s32.totalorder %s34, 1
      %s36 = scalar_select %p35, 0, %s34
      %s37 = sadd.s32 1, %s26
      %s38 = scalar_select %p35, %s37, %s26
      %p39 = scmp.ge.s32.totalorder %s38, 1
      %s40 = scalar_select %p39, 0, %s38
      %s41 = sadd.s32 1, %s25
      %s42 = scalar_select %p39, %s41, %s25
      %p43 = scmp.ge.s32.totalorder %s42, 2
      %s44 = scalar_select %p43, 0, %s42
      %s45 = ssub.s32 %s25, %s44
      %s46 = ssub.s32 %s27, %s36
      %s47 = sor.u32 %s45, %s46
      %s48 = ssub.s32 %s26, %s40
      %s49 = sor.u32 %s47, %s48
      %p50 = scmp.eq.s32.totalorder %s49, 0
      %s52 = sadd.s32 %s51, 1
      %s53 = scalar_select %p50, %s51, %s52
      %p56 = pneg %p50
      %p57 = scmp.eq.s32.totalorder %s18, 1
      %p58 = por %p56, %p57
      %p59 = scmp.ne.s32.totalorder %s51, %s54
      %p60 = scmp.eq.s32.totalorder %s18, 0
      %p61 = por %p59, %p60
      %p62 = scmp.ne.s32.totalorder %s51, %s54
      %p63 = scmp.eq.s32.totalorder %s23, 1
      %p64 = por %p62, %p63
      %p65 = scmp.ne.s32.totalorder %s54, %s55
      %p66 = scmp.eq.s32.totalorder %s23, 0
      %p67 = por %p65, %p66
      %p68 = scmp.ne.s32.totalorder %s54, %s55
      %p69 = scmp.eq.s32.totalorder %s24, 1
      %p70 = por %p68, %p69
      %p72 = scmp.ne.s32.totalorder %s55, %s71
      %p73 = scmp.eq.s32.totalorder %s24, 0
      %p74 = por %p72, %p73
      %s75 = ssub.s32 %s25, %s44
      %s76 = ssub.s32 %s26, %s40
      %s77 = sor.u32 %s75, %s76
      %p78 = scmp.eq.s32.totalorder %s77, 0
      %s80 = sadd.s32 %s79, 1
      %s81 = scalar_select %p78, %s79, %s80
      %p84 = pneg %p78
      %p85 = scmp.eq.s32.totalorder %s18, 1
      %p86 = por %p84, %p85
      %p87 = scmp.ne.s32.totalorder %s79, %s82
      %p88 = scmp.eq.s32.totalorder %s18, 0
      %p89 = por %p87, %p88
      %p90 = scmp.ne.s32.totalorder %s79, %s82
      %p91 = scmp.eq.s32.totalorder %s23, 1
      %p92 = por %p90, %p91
      %p93 = scmp.ne.s32.totalorder %s82, %s83
      %p94 = scmp.eq.s32.totalorder %s23, 0
      %p95 = por %p93, %p94
      %p96 = scmp.ne.s32.totalorder %s82, %s83
      %p97 = scmp.eq.s32.totalorder %s24, 1
      %p98 = por %p96, %p97
      %p100 = scmp.ne.s32.totalorder %s83, %s99
      %p101 = scmp.eq.s32.totalorder %s24, 0
      %p102 = por %p100, %p101
      %s103 = ssub.s32 %s27, %s36
      %p104 = scmp.eq.s32.totalorder %s103, 0
      %s106 = sadd.s32 %s105, 1
      %s107 = scalar_select %p104, %s105, %s106
      %p110 = pneg %p104
      %p111 = scmp.eq.s32.totalorder %s18, 1
      %p112 = por %p110, %p111
      %p113 = scmp.ne.s32.totalorder %s105, %s108
      %p114 = scmp.eq.s32.totalorder %s18, 0
      %p115 = por %p113, %p114
      %p116 = scmp.ne.s32.totalorder %s105, %s108
      %p117 = scmp.eq.s32.totalorder %s23, 1
      %p118 = por %p116, %p117
      %p119 = scmp.ne.s32.totalorder %s108, %s109
      %p120 = scmp.eq.s32.totalorder %s23, 0
      %p121 = por %p119, %p120
      %p122 = scmp.ne.s32.totalorder %s108, %s109
      %p123 = scmp.eq.s32.totalorder %s24, 1
      %p124 = por %p122, %p123
      %p126 = scmp.ne.s32.totalorder %s109, %s125
      %p127 = scmp.eq.s32.totalorder %s24, 0
      %p128 = por %p126, %p127
      %s129 = ssub.s32 %s25, %s44
      %s130 = ssub.s32 %s27, %s36
      %s131 = sor.u32 %s129, %s130
      %s132 = ssub.s32 %s26, %s40
      %s133 = sor.u32 %s131, %s132
      %p134 = scmp.eq.s32.totalorder %s133, 0
      %s136 = sadd.s32 %s135, 1
      %s137 = scalar_select %p134, %s135, %s136
      %p140 = pneg %p134
      %p141 = scmp.eq.s32.totalorder %s18, 1
      %p142 = por %p140, %p141
      %p143 = scmp.ne.s32.totalorder %s135, %s138
      %p144 = scmp.eq.s32.totalorder %s18, 0
      %p145 = por %p143, %p144
      %p146 = scmp.ne.s32.totalorder %s135, %s138
      %p147 = scmp.eq.s32.totalorder %s23, 1
      %p148 = por %p146, %p147
      %p149 = scmp.ne.s32.totalorder %s138, %s139
      %p150 = scmp.eq.s32.totalorder %s23, 0
      %p151 = por %p149, %p150
      %p152 = scmp.ne.s32.totalorder %s138, %s139
      %p153 = scmp.eq.s32.totalorder %s24, 1
      %p154 = por %p152, %p153
      %p156 = scmp.ne.s32.totalorder %s139, %s155
      %p157 = scmp.eq.s32.totalorder %s24, 0
      %p158 = por %p156, %p157
      %p159 = scmp.le.s32.totalorder 1, %s18
      %p160 = scmp.lt.s32.totalorder %s18, 3
      %p161 = pnand %p159, %p160
      %p162 = pneg %p161
      // Predicated region
      $region9: #{tpu_custom_call.1} parent=5 // pred_check
        _
      $region10: #{tpu_custom_call.1} parent=5 // pred_check_branch
        %164 = sbr.rel (%p161) target = $region12
      $region11: #{tpu_custom_call.1} parent=5 // pred_region
        %s165 = ssub.s32 %s18, 1
        // Predicated region
        $region13: #{tpu_custom_call.1} parent=11 // pred_check
          %p166 = pneg %p121
        $region14: #{tpu_custom_call.1} parent=11 // pred_check_branch
          %168 = sbr.rel (%p166) target = $region16
        $region15: #{tpu_custom_call.1} parent=11 // pred_region
          %s169 = smul.u32 4, %s30
          %p170 = scmp.lt.s32.totalorder %s169, 3
          %s171 = scalar_select %p170, %s169, 3
          %s172 = scalar_lea.vmem %s2, %s171
          %s173 = smul.u32 4, %s30
        $region16: #{tpu_custom_call.1} parent=11 // pred_fallthru
          _
      $region12: #{tpu_custom_call.1} parent=5 // pred_fallthru
        _
      %p174 = scmp.lt.s32.totalorder %s18, 2
      // Predicated region
      $region17: #{tpu_custom_call.1} parent=5 // pred_check
        %p175 = pneg %p174
      $region18: #{tpu_custom_call.1} parent=5 // pred_check_branch
        %177 = sbr.rel (%p175) target = $region20
      $region19: #{tpu_custom_call.1} parent=5 // pred_region
        // Predicated region
        $region21: #{tpu_custom_call.1} parent=19 // pred_check
          %p178 = pneg %p61
        $region22: #{tpu_custom_call.1} parent=19 // pred_check_branch
          %180 = sbr.rel (%p178) target = $region24
        $region23: #{tpu_custom_call.1} parent=19 // pred_region
          %s181 = sand.u32 %s51, 1
          %s182 = scalar_lea.sflag [#allocation3], %s181
          %s183 = sand.u32 %s51, 1
          %s184 = smul.addr %s183, 8
          %s185 = scalar_lea.vmem [#allocation2], %s184
          %s186 = smul.u32 4, %s27
          %s188 = ssub.s32 128, 128
          %189 = vsyncadd %s182, %s188
          %s190 = sadd.s32 %s26, %s186
          %s191 = smul.addr %s25, 4
          %s192 = sadd.s32 %s190, %s191
          %s193 = smul.addr %s192, 32
          %s194 = scalar_lea.hbm %s0, %s193
          %s195 = sshll.u32 %s185, 4
          %s196 = int_to_ptr.vmem [resolvable:$true] %s195
          %201 = dma.hbm_to_vmem [thread:$0]  %s194, 128, %s196, %s182, 32, 32, 2
        $region24: #{tpu_custom_call.1} parent=19 // pred_fallthru
          _
        // Predicated region
        $region25: #{tpu_custom_call.1} parent=19 // pred_check
          %p202 = pneg %p89
        $region26: #{tpu_custom_call.1} parent=19 // pred_check_branch
          %204 = sbr.rel (%p202) target = $region28
        $region27: #{tpu_custom_call.1} parent=19 // pred_region
          %s205 = sand.u32 %s79, 1
          %s206 = scalar_lea.sflag [#allocation6], %s205
          %s207 = sand.u32 %s79, 1
          %s208 = smul.addr %s207, 2
          %s209 = scalar_lea.vmem [#allocation5], %s208
          %s211 = ssub.s32 32, 32
          %212 = vsyncadd %s206, %s211
          %s213 = sadd.s32 %s26, %s25
          %s214 = smul.addr %s213, 32
          %s215 = scalar_lea.hbm %s1, %s214
          %s217 = sshll.u32 %s209, 4
          %s218 = int_to_ptr.vmem [resolvable:$true] %s217
          %220 = dma.hbm_to_vmem [thread:$0]  %s215, 32, %s218, %s206
        $region28: #{tpu_custom_call.1} parent=19 // pred_fallthru
          _
      $region20: #{tpu_custom_call.1} parent=5 // pred_fallthru
        _
      %p221 = scmp.le.s32.totalorder 1, %s18
      %p222 = scmp.lt.s32.totalorder %s18, 3
      %p223 = pnand %p221, %p222
      %p224 = pneg %p223
      // Predicated region
      $region29: #{tpu_custom_call.1} parent=5 // pred_check
        _
      $region30: #{tpu_custom_call.1} parent=5 // pred_check_branch
        %226 = sbr.rel (%p223) target = $region32
      $region31: #{tpu_custom_call.1} parent=5 // pred_region
        %s227 = ssub.s32 %s18, 1
        %s228 = sand.u32 %s54, 1
        %s229 = scalar_lea.sflag [#allocation3], %s228
        %s230 = sand.u32 %s54, 1
        %s231 = smul.addr %s230, 8
        %s232 = scalar_lea.vmem [#allocation2], %s231
        // Predicated region
        $region33: #{tpu_custom_call.1} parent=31 // pred_check
          %p233 = pneg %p67
        $region34: #{tpu_custom_call.1} parent=31 // pred_check_branch
          %235 = sbr.rel (%p233) target = $region36
        $region35: #{tpu_custom_call.1} parent=31 // pred_region
          %236 = dma.done %s229, 128
        $region36: #{tpu_custom_call.1} parent=31 // pred_fallthru
          _
        %s237 = sand.u32 %s82, 1
        %s238 = scalar_lea.sflag [#allocation6], %s237
        %s239 = sand.u32 %s82, 1
        %s240 = smul.addr %s239, 2
        %s241 = scalar_lea.vmem [#allocation5], %s240
        // Predicated region
        $region37: #{tpu_custom_call.1} parent=31 // pred_check
          %p242 = pneg %p95
        $region38: #{tpu_custom_call.1} parent=31 // pred_check_branch
          %244 = sbr.rel (%p242) target = $region40
        $region39: #{tpu_custom_call.1} parent=31 // pred_region
          %245 = dma.done %s238, 32
        $region40: #{tpu_custom_call.1} parent=31 // pred_fallthru
          _
        %s246 = sand.u32 %s54, 1
        %s247 = scalar_lea.sflag [#allocation3], %s246
        %s248 = sand.u32 %s54, 1
        %s249 = smul.addr %s248, 8
        %s250 = scalar_lea.vmem [#allocation2], %s249
        %p251 = pneg %p67
        %p252 = pneg %p64
        %s253 = sand.u32 %s82, 1
        %s254 = scalar_lea.sflag [#allocation6], %s253
        %s255 = sand.u32 %s82, 1
        %s256 = smul.addr %s255, 2
        %s257 = scalar_lea.vmem [#allocation5], %s256
        %p258 = pneg %p95
        %p259 = pneg %p92
        %s260 = smul.u32 4, %s30
        %p261 = scmp.lt.s32.totalorder %s260, 3
        %s262 = scalar_select %p261, %s260, 3
        %s263 = scalar_lea.vmem %s2, %s262
        %p264 = pneg %p121
        %p265 = pneg %p118
        %p266 = pneg %p151
        %p267 = pneg %p148
        %s268 = sand.u32 %s138, 1
        %s269 = scalar_lea.sflag [#allocation4], %s268
        %s270 = sand.u32 %s138, 1
        %s271 = smul.addr %s270, 8
        %s272 = scalar_lea.vmem [#allocation7], %s271
        %s273 = smul.u32 4, %s30
        %s274 = smul.u32 4, %s30
        %p275 = scmp.lt.s32.totalorder %s274, 3
        %s276 = scalar_select %p275, %s274, 3
        %s277 = scalar_lea.vmem %s2, %s276
        %s278 = smul.u32 4, %s30
        %s279 = smul.u32 4, %s30
        %v280 = vld [vmem:[%s232] sm:$0x3]
        %v281 = vld [vmem:[%s232 + $0x2] sm:$0x3]
        %v282 = vld [vmem:[%s232 + $0x4] sm:$0x3]
        %v283 = vld [vmem:[%s232 + $0x6] sm:$0x3]
        %v284 = vld [vmem:[%s241] sm:$0x3]
        %v285 = vld [vmem:[%s277] sm:$0x1]
        %v286 = vld [vmem:[%s277 + $0x1] sm:$0x1]
        %v287 = vld [vmem:[%s277 + $0x2] sm:$0x1]
        %v288 = vld [vmem:[%s277 + $0x3] sm:$0x1]
        %v293 = vlaneseq
        %v294 = vshrl.u32 %v293, 7
        %v295 = vsub.s32 0, %v294
        %v296 = vrot.slane %v285, %v295
        %v297 = vlaneseq
        %v298 = vshrl.u32 %v297, 7
        %v299 = vsub.s32 0, %v298
        %v300 = vrot.slane %v286, %v299
        %v301 = vlaneseq
        %v302 = vshrl.u32 %v301, 7
        %v303 = vsub.s32 0, %v302
        %v304 = vrot.slane %v287, %v303
        %v305 = vlaneseq
        %v306 = vshrl.u32 %v305, 7
        %v307 = vsub.s32 0, %v306
        %v308 = vrot.slane %v288, %v307
        %v313 = vmul.f32 %v296, %v284
        %v314 = vmul.f32 %v300, %v284
        %v315 = vmul.f32 %v304, %v284
        %v316 = vmul.f32 %v308, %v284
        %v317 = vadd.f32 %v280, %v313
        %v318 = vadd.f32 %v281, %v314
        %v319 = vadd.f32 %v282, %v315
        %v320 = vadd.f32 %v283, %v316
        %321 = vst [vmem:[%s272] sm:$0x3] %v317
        %322 = vst [vmem:[%s272 + $0x2] sm:$0x3] %v318
        %323 = vst [vmem:[%s272 + $0x4] sm:$0x3] %v319
        %324 = vst [vmem:[%s272 + $0x6] sm:$0x3] %v320
        %s325 = sand.u32 %s138, 1
        %s326 = scalar_lea.sflag [#allocation4], %s325
        %s327 = sand.u32 %s138, 1
        %s328 = smul.addr %s327, 8
        %s329 = scalar_lea.vmem [#allocation7], %s328
        // Predicated region
        $region41: #{tpu_custom_call.1} parent=31 // pred_check
          %p330 = pneg %p148
        $region42: #{tpu_custom_call.1} parent=31 // pred_check_branch
          %332 = sbr.rel (%p330) target = $region44
        $region43: #{tpu_custom_call.1} parent=31 // pred_region
          %s333 = smul.u32 4, %s30
          %s335 = ssub.s32 128, 128
          %336 = vsyncadd %s326, %s335
          %s337 = sadd.s32 %s29, %s333
          %s338 = smul.addr %s28, 4
          %s339 = sadd.s32 %s337, %s338
          %s340 = smul.addr %s339, 32
          %s341 = scalar_lea.hbm %s3, %s340
          %s342 = sshll.u32 %s329, 4
          %s343 = int_to_ptr.vmem [resolvable:$true] %s342
          %348 = dma.vmem_to_hbm [thread:$0]  %s343, 128, %s341, %s326, 32, 32, 2
        $region44: #{tpu_custom_call.1} parent=31 // pred_fallthru
          _
      $region32: #{tpu_custom_call.1} parent=5 // pred_fallthru
        _
      %p349 = scmp.le.s32.totalorder 2, %s18
      // Predicated region
      $region45: #{tpu_custom_call.1} parent=5 // pred_check
        %p350 = pneg %p349
      $region46: #{tpu_custom_call.1} parent=5 // pred_check_branch
        %352 = sbr.rel (%p350) target = $region48
      $region47: #{tpu_custom_call.1} parent=5 // pred_region
        %s353 = ssub.s32 %s18, 2
        // Predicated region
        $region49: #{tpu_custom_call.1} parent=47 // pred_check
          %p354 = pneg %p154
        $region50: #{tpu_custom_call.1} parent=47 // pred_check_branch
          %356 = sbr.rel (%p354) target = $region52
        $region51: #{tpu_custom_call.1} parent=47 // pred_region
          %s357 = sand.u32 %s139, 1
          %s358 = scalar_lea.sflag [#allocation4], %s357
          %s359 = sand.u32 %s139, 1
          %s360 = smul.addr %s359, 8
          %s361 = scalar_lea.vmem [#allocation7], %s360
          %362 = dma.done %s358, 128
        $region52: #{tpu_custom_call.1} parent=47 // pred_fallthru
          _
      $region48: #{tpu_custom_call.1} parent=5 // pred_fallthru
        _
    $region6: #{tpu_custom_call.1} parent=1 // loop_footer
      %s22 = sadd.s32 1, %s18
    $region7: #{tpu_custom_call.1} parent=1 // loop_footer_branch
      %17 = sbr.rel target = $region3
    $region8: #{tpu_custom_call.1} parent=1 // loop_exit
      _
    %363 = vsyncpa [#allocation3], 1
    %s364 = scalar_lea.sflag [#allocation3], 1
    %365 = vsyncpa %s364, 1
    %366 = vsyncpa [#allocation6], 1
    %s367 = scalar_lea.sflag [#allocation6], 1
    %368 = vsyncpa %s367, 1
    %369 = vsyncpa [#allocation4], 1
    %s370 = scalar_lea.sflag [#allocation4], 1
    %371 = vsyncpa %s370, 1

</llo_original>
